<compile_context>
chip_gen: v6e
topology: v6e:2x2x1
jax: 0.10.0
libtpu: 0.0.40
codegen_flags: <defaults>
</compile_context>

<pallas_src>
import jax
import jax.numpy as jnp
from jax.experimental import pallas as pl
from jax.experimental.pallas import tpu as pltpu


A_PAD = 128  # lane-dense padded width for logits / actions / msg outputs


def _round_up(x, m):
    return (x + m - 1) // m * m


def _pad_cols(a, width):
    return jnp.pad(a, ((0, 0), (0, width - a.shape[1])))


def _lrelu(x):
    # nn.LeakyReLU default negative_slope = 0.01
    return jnp.where(x > 0, x, 0.01 * x)


def _layer_norm(x, g, b, eps=1e-5):
    mu = jnp.mean(x, axis=-1, keepdims=True)
    var = jnp.mean((x - mu) ** 2, axis=-1, keepdims=True)
    return (x - mu) * jax.lax.rsqrt(var + eps) * g + b


def _mxu(a, b):
    # bf16 MXU operands (weights already bf16), f32 accumulation.
    return jnp.dot(a.astype(jnp.bfloat16), b, preferred_element_type=jnp.float32)


def _policy_kernel(
    obs_ref, avail_ref, gumbel_ref, eps_ref, bias_ref,
    w0_ref, w1_ref, head_w_ref, e2m_w_ref, e2v_w_ref,
    m1o_w_ref, m1l_w_ref, m2_w_ref,
    actions_ref, msg_ref,
):
    obs_dim = obs_ref.shape[1]
    H = w0_ref.shape[1]

    def bvec(row, width):
        # static (1, width) prefix slice of the packed bias / LayerNorm slab
        return bias_ref[row:row + 1, :width]

    obs = obs_ref[...]

    # ---- MLPBase: feature LayerNorm + 2 x (Linear -> ReLU -> LayerNorm) ----
    x = _layer_norm(obs, bvec(0, obs_dim), bvec(1, obs_dim))
    h = _mxu(x, w0_ref[...]) + bvec(2, H)
    h = jnp.maximum(h, 0.0)
    h = _layer_norm(h, bvec(3, H), bvec(4, H))
    h = _mxu(h, w1_ref[...]) + bvec(5, H)
    h = jnp.maximum(h, 0.0)
    h = _layer_norm(h, bvec(6, H), bvec(7, H))

    # ---- fused head: [logits padded to A_PAD | embed_net layer-1] ----
    r = _mxu(h, head_w_ref[...]) + bvec(8, A_PAD + H)
    # avail mask is zero on padded columns, so they are forced to -1e10.
    logits = jnp.where(avail_ref[...] > 0.5, r[:, :A_PAD], -1e10)
    actions = jnp.argmax(logits + gumbel_ref[...], axis=-1).astype(jnp.int32)
    actions_ref[...] = jnp.broadcast_to(actions[:, None], actions_ref.shape)

    # ---- embed_net layer-2 (split mean / log-var) + reparameterized sample ----
    e = _lrelu(r[:, A_PAD:])
    mean = _mxu(e, e2m_w_ref[...]) + bvec(9, H)
    var = jnp.maximum(jnp.exp(_mxu(e, e2v_w_ref[...]) + bvec(10, H)), 0.1)  # var_floor
    latent = mean + jnp.sqrt(var) * eps_ref[...]

    # ---- msg_net: split first weight replaces cat([obs, latent], -1) ----
    m = _lrelu(_mxu(obs, m1o_w_ref[...]) + _mxu(latent, m1l_w_ref[...]) + bvec(11, H))
    msg_ref[...] = _mxu(m, m2_w_ref[...]) + bvec(12, A_PAD)


def _linear_params(key, fan_in, fan_out):
    kw, kb = jax.random.split(key)
    w = jax.random.normal(kw, (fan_in, fan_out), jnp.float32) / jnp.sqrt(float(fan_in))
    b = 0.01 * jax.random.normal(kb, (1, fan_out), jnp.float32)
    return w, b


def init_params(key, obs_shape, n_actions, hidden):
    """Deterministic synthetic parameters (shapes match the module's __init__)."""
    obs_dim = obs_shape + n_actions            # use_comm=True
    H = hidden
    keys = jax.random.split(key, 8)
    p = {}
    # MLPBase
    p["fn_g"] = jnp.ones((1, obs_dim), jnp.float32)
    p["fn_b"] = jnp.zeros((1, obs_dim), jnp.float32)
    p["w0"], p["b0"] = _linear_params(keys[0], obs_dim, H)
    p["ln0_g"] = jnp.ones((1, H), jnp.float32)
    p["ln0_b"] = jnp.zeros((1, H), jnp.float32)
    p["w1"], p["b1"] = _linear_params(keys[1], H, H)
    p["ln1_g"] = jnp.ones((1, H), jnp.float32)
    p["ln1_b"] = jnp.zeros((1, H), jnp.float32)
    # ACTLayer (Discrete -> Categorical)
    p["act_w"], p["act_b"] = _linear_params(keys[2], H, n_actions)
    # embed_net: Linear(H,H) -> LeakyReLU -> Linear(H, 2H)
    p["e1_w"], p["e1_b"] = _linear_params(keys[3], H, H)
    p["e2_w"], p["e2_b"] = _linear_params(keys[4], H, 2 * H)
    # msg_net: Linear(obs_dim + H, H) -> LeakyReLU -> Linear(H, n_actions)
    p["m1_w"], p["m1_b"] = _linear_params(keys[5], obs_dim + H, H)
    p["m2_w"], p["m2_b"] = _linear_params(keys[6], H, n_actions)
    return p


def stochastic_mlp_policy_forward(params, obs, messages, available_actions=None,
                                  stochastic=True, key=None, block_batch=512):
    """JAX/Pallas equivalent of StochasticMlpPolicy.forward (use_comm=True)."""
    B = obs.shape[0]
    obs_dim, H = params["w0"].shape
    A = params["act_w"].shape[1]

    # ---- glue: comm concat + host-side noise (keeps jax.random stream) ----
    obs_full = jnp.concatenate([obs, messages.sum(axis=1)], axis=-1).astype(jnp.float32)

    if available_actions is None:
        available_actions = jnp.ones((B, A), jnp.float32)
    avail = _pad_cols(available_actions.astype(jnp.float32), A_PAD)  # padded cols -> masked

    k1, k2 = jax.random.split(key)
    gumbel = (jax.random.gumbel(k1, (B, A_PAD), jnp.float32) if stochastic
              else jnp.zeros((B, A_PAD), jnp.float32))
    eps = jax.random.normal(k2, (B, H), jnp.float32)

    # ---- batch tiling: pad rows to a multiple of the batch tile ----
    TB = min(block_batch, _round_up(B, 8))
    B_pad = _round_up(B, TB)

    def pad_rows(a):
        return jnp.pad(a, ((0, B_pad - B), (0, 0)))

    obs_full, avail, gumbel, eps = map(pad_rows, (obs_full, avail, gumbel, eps))

    # ---- pack the 13 tiny bias / LayerNorm vectors into one slab (1 DMA) ----
    padw = _round_up(max(obs_dim, H, A_PAD + H, A_PAD), 128)
    head_b = jnp.concatenate([_pad_cols(params["act_b"], A_PAD), params["e1_b"]], axis=-1)
    rows = [params["fn_g"], params["fn_b"],
            params["b0"], params["ln0_g"], params["ln0_b"],
            params["b1"], params["ln1_g"], params["ln1_b"],
            head_b,
            params["e2_b"][:, :H], params["e2_b"][:, H:],
            params["m1_b"], _pad_cols(params["m2_b"], A_PAD)]
    bias_slab = jnp.concatenate(
        [_pad_cols(r.astype(jnp.float32), padw) for r in rows], axis=0)

    # ---- weights: bf16 MXU operands, pre-split / fused / lane-padded ----
    bf16 = jnp.bfloat16
    w0 = params["w0"].astype(bf16)
    w1 = params["w1"].astype(bf16)
    head_w = jnp.concatenate([_pad_cols(params["act_w"], A_PAD), params["e1_w"]],
                             axis=-1).astype(bf16)
    e2m_w = params["e2_w"][:, :H].astype(bf16)
    e2v_w = params["e2_w"][:, H:].astype(bf16)
    m1o_w = params["m1_w"][:obs_dim].astype(bf16)
    m1l_w = params["m1_w"][obs_dim:].astype(bf16)
    m2_w = _pad_cols(params["m2_w"], A_PAD).astype(bf16)

    acts = (obs_full, avail, gumbel, eps)
    weights = (bias_slab, w0, w1, head_w, e2m_w, e2v_w, m1o_w, m1l_w, m2_w)

    batch_map = lambda i: (i, 0)
    const_map = lambda i: (0, 0)
    in_specs = ([pl.BlockSpec((TB, a.shape[1]), batch_map) for a in acts]
                + [pl.BlockSpec(w.shape, const_map) for w in weights])

    actions_pad, msg_pad = pl.pallas_call(
        _policy_kernel,
        out_shape=(
            jax.ShapeDtypeStruct((B_pad, A_PAD), jnp.int32),    # actions slab
            jax.ShapeDtypeStruct((B_pad, A_PAD), jnp.float32),  # msg slab
        ),
        grid_spec=pltpu.PrefetchScalarGridSpec(
            num_scalar_prefetch=0,
            grid=(B_pad // TB,),
            in_specs=in_specs,
            out_specs=(pl.BlockSpec((TB, A_PAD), batch_map),
                       pl.BlockSpec((TB, A_PAD), batch_map)),
        ),
        compiler_params=pltpu.CompilerParams(
            dimension_semantics=("parallel",)),
    )(*acts, *weights)

    # lane-dense slabs -> module-shaped outputs
    # (int32 indices; the PyTorch module produces int64 — downstream must not
    #  assume 64-bit.)
    return actions_pad[:B, :1], msg_pad[:B, :A]


if __name__ == "__main__":
    B, OBS, A, H, N_AGENTS = 8, 20, 5, 32, 3   # hidden_sizes = [32, 32]

    root = jax.random.PRNGKey(0)
    k_param, k_obs, k_msg, k_avail, k_fwd = jax.random.split(root, 5)

    params = init_params(k_param, OBS, A, H)
    obs = jax.random.normal(k_obs, (B, OBS), jnp.float32)
    messages = jax.random.normal(k_msg, (B, N_AGENTS, A), jnp.float32)
    # mask one action for half the batch to exercise available_actions
    available_actions = jnp.ones((B, A), jnp.float32).at[: B // 2, -1].set(0.0)

    actions, msg = stochastic_mlp_policy_forward(
        params, obs, messages, available_actions, stochastic=True, key=k_fwd
    )
    jax.block_until_ready((actions, msg))
    assert actions.shape == (B, 1) and actions.dtype == jnp.int32
    assert msg.shape == (B, A) and msg.dtype == jnp.float32
    assert bool(jnp.all((actions >= 0) & (actions < A)))
    # masked action must never be sampled for the masked rows
    assert bool(jnp.all(actions[: B // 2, 0] != A - 1))
    print("KERNEL_OK")
</pallas_src>

<mosaic_0001>
module attributes {stable_mosaic.version = 11 : i64} {
  func.func @_policy_kernel(%arg0: i32, %arg1: memref<8x25xf32, #tpu.memory_space<vmem>>, %arg2: memref<8x128xf32, #tpu.memory_space<vmem>>, %arg3: memref<8x128xf32, #tpu.memory_space<vmem>>, %arg4: memref<8x32xf32, #tpu.memory_space<vmem>>, %arg5: memref<13x256xf32, #tpu.memory_space<vmem>>, %arg6: memref<25x32xbf16, #tpu.memory_space<vmem>>, %arg7: memref<32x32xbf16, #tpu.memory_space<vmem>>, %arg8: memref<32x160xbf16, #tpu.memory_space<vmem>>, %arg9: memref<32x32xbf16, #tpu.memory_space<vmem>>, %arg10: memref<32x32xbf16, #tpu.memory_space<vmem>>, %arg11: memref<25x32xbf16, #tpu.memory_space<vmem>>, %arg12: memref<32x32xbf16, #tpu.memory_space<vmem>>, %arg13: memref<32x128xbf16, #tpu.memory_space<vmem>>, %arg14: memref<8x128xi32, #tpu.memory_space<vmem>>, %arg15: memref<8x128xf32, #tpu.memory_space<vmem>>) attributes {dimension_semantics = [#tpu.dimension_semantics<parallel>], iteration_bounds = array<i64: 1>, scalar_prefetch = 0 : i64, scratch_operands = 0 : i64, tpu.core_type = #tpu.core_type<tc>, window_params = [{transform_indices = @transform_0, window_bounds = array<i64: 8, 25>}, {transform_indices = @transform_1, window_bounds = array<i64: 8, 128>}, {transform_indices = @transform_2, window_bounds = array<i64: 8, 128>}, {transform_indices = @transform_3, window_bounds = array<i64: 8, 32>}, {pipeline_mode = #tpu.pipeline_mode<synchronous>, transform_indices = @transform_4, window_bounds = array<i64: 13, 256>}, {pipeline_mode = #tpu.pipeline_mode<synchronous>, transform_indices = @transform_5, window_bounds = array<i64: 25, 32>}, {pipeline_mode = #tpu.pipeline_mode<synchronous>, transform_indices = @transform_6, window_bounds = array<i64: 32, 32>}, {pipeline_mode = #tpu.pipeline_mode<synchronous>, transform_indices = @transform_7, window_bounds = array<i64: 32, 160>}, {pipeline_mode = #tpu.pipeline_mode<synchronous>, transform_indices = @transform_8, window_bounds = array<i64: 32, 32>}, {pipeline_mode = #tpu.pipeline_mode<synchronous>, transform_indices = @transform_9, window_bounds = array<i64: 32, 32>}, {pipeline_mode = #tpu.pipeline_mode<synchronous>, transform_indices = @transform_10, window_bounds = array<i64: 25, 32>}, {pipeline_mode = #tpu.pipeline_mode<synchronous>, transform_indices = @transform_11, window_bounds = array<i64: 32, 32>}, {pipeline_mode = #tpu.pipeline_mode<synchronous>, transform_indices = @transform_12, window_bounds = array<i64: 32, 128>}, {transform_indices = @transform_13, window_bounds = array<i64: 8, 128>}, {transform_indices = @transform_14, window_bounds = array<i64: 8, 128>}]} {
    %c0 = arith.constant 0 : index
    %c0_0 = arith.constant 0 : index
    %0 = vector.load %arg1[%c0, %c0_0] : memref<8x25xf32, #tpu.memory_space<vmem>>, vector<8x25xf32>
    %c0_1 = arith.constant 0 : index
    %c0_2 = arith.constant 0 : index
    %1 = vector.load %arg5[%c0_1, %c0_2] : memref<13x256xf32, #tpu.memory_space<vmem>>, vector<1x25xf32>
    %c1 = arith.constant 1 : index
    %c0_3 = arith.constant 0 : index
    %2 = vector.load %arg5[%c1, %c0_3] : memref<13x256xf32, #tpu.memory_space<vmem>>, vector<1x25xf32>
    %cst = arith.constant dense<0.000000e+00> : vector<8xf32>
    %3 = vector.multi_reduction <add>, %0, %cst [1] : vector<8x25xf32> to vector<8xf32>
    %4 = vector.shape_cast %3 : vector<8xf32> to vector<8x1xf32>
    %cst_4 = arith.constant 2.500000e+01 : f32
    %5 = vector.broadcast %cst_4 : f32 to vector<8x1xf32>
    %6 = arith.divf %4, %5 : vector<8x1xf32>
    %7 = vector.broadcast %6 : vector<8x1xf32> to vector<8x25xf32>
    %8 = arith.subf %0, %7 : vector<8x25xf32>
    %9 = arith.mulf %8, %8 : vector<8x25xf32>
    %cst_5 = arith.constant dense<0.000000e+00> : vector<8xf32>
    %10 = vector.multi_reduction <add>, %9, %cst_5 [1] : vector<8x25xf32> to vector<8xf32>
    %11 = vector.shape_cast %10 : vector<8xf32> to vector<8x1xf32>
    %cst_6 = arith.constant 2.500000e+01 : f32
    %12 = vector.broadcast %cst_6 : f32 to vector<8x1xf32>
    %13 = arith.divf %11, %12 : vector<8x1xf32>
    %14 = vector.broadcast %6 : vector<8x1xf32> to vector<8x25xf32>
    %15 = arith.subf %0, %14 : vector<8x25xf32>
    %cst_7 = arith.constant 9.99999974E-6 : f32
    %16 = vector.broadcast %cst_7 : f32 to vector<8x1xf32>
    %17 = arith.addf %13, %16 : vector<8x1xf32>
    %18 = math.rsqrt %17 : vector<8x1xf32>
    %19 = vector.broadcast %18 : vector<8x1xf32> to vector<8x25xf32>
    %20 = arith.mulf %15, %19 : vector<8x25xf32>
    %21 = vector.broadcast %1 : vector<1x25xf32> to vector<8x25xf32>
    %22 = arith.mulf %20, %21 : vector<8x25xf32>
    %23 = vector.broadcast %2 : vector<1x25xf32> to vector<8x25xf32>
    %24 = arith.addf %22, %23 : vector<8x25xf32>
    %c0_8 = arith.constant 0 : index
    %c0_9 = arith.constant 0 : index
    %25 = vector.load %arg6[%c0_8, %c0_9] : memref<25x32xbf16, #tpu.memory_space<vmem>>, vector<25x32xbf16>
    %26 = arith.truncf %24 : vector<8x25xf32> to vector<8x25xbf16>
    %cst_10 = arith.constant dense<0.000000e+00> : vector<8x32xf32>
    %27 = tpu.matmul %26, %25, %cst_10 {dimension_numbers = #tpu.dot_dimension_numbers<[1], [0], [0], [1], [0, 0, 1, 1], [], []>} : vector<8x25xbf16>, vector<25x32xbf16>, vector<8x32xf32> -> vector<8x32xf32>
    %c2 = arith.constant 2 : index
    %c0_11 = arith.constant 0 : index
    %28 = vector.load %arg5[%c2, %c0_11] : memref<13x256xf32, #tpu.memory_space<vmem>>, vector<1x32xf32>
    %29 = vector.broadcast %28 : vector<1x32xf32> to vector<8x32xf32>
    %30 = arith.addf %27, %29 : vector<8x32xf32>
    %cst_12 = arith.constant 0.000000e+00 : f32
    %31 = vector.broadcast %cst_12 : f32 to vector<8x32xf32>
    %32 = arith.maximumf %30, %31 : vector<8x32xf32>
    %c3 = arith.constant 3 : index
    %c0_13 = arith.constant 0 : index
    %33 = vector.load %arg5[%c3, %c0_13] : memref<13x256xf32, #tpu.memory_space<vmem>>, vector<1x32xf32>
    %c4 = arith.constant 4 : index
    %c0_14 = arith.constant 0 : index
    %34 = vector.load %arg5[%c4, %c0_14] : memref<13x256xf32, #tpu.memory_space<vmem>>, vector<1x32xf32>
    %cst_15 = arith.constant dense<0.000000e+00> : vector<8xf32>
    %35 = vector.multi_reduction <add>, %32, %cst_15 [1] : vector<8x32xf32> to vector<8xf32>
    %36 = vector.shape_cast %35 : vector<8xf32> to vector<8x1xf32>
    %cst_16 = arith.constant 3.200000e+01 : f32
    %37 = vector.broadcast %cst_16 : f32 to vector<8x1xf32>
    %38 = arith.divf %36, %37 : vector<8x1xf32>
    %39 = vector.broadcast %38 : vector<8x1xf32> to vector<8x32xf32>
    %40 = arith.subf %32, %39 : vector<8x32xf32>
    %41 = arith.mulf %40, %40 : vector<8x32xf32>
    %cst_17 = arith.constant dense<0.000000e+00> : vector<8xf32>
    %42 = vector.multi_reduction <add>, %41, %cst_17 [1] : vector<8x32xf32> to vector<8xf32>
    %43 = vector.shape_cast %42 : vector<8xf32> to vector<8x1xf32>
    %cst_18 = arith.constant 3.200000e+01 : f32
    %44 = vector.broadcast %cst_18 : f32 to vector<8x1xf32>
    %45 = arith.divf %43, %44 : vector<8x1xf32>
    %46 = vector.broadcast %38 : vector<8x1xf32> to vector<8x32xf32>
    %47 = arith.subf %32, %46 : vector<8x32xf32>
    %cst_19 = arith.constant 9.99999974E-6 : f32
    %48 = vector.broadcast %cst_19 : f32 to vector<8x1xf32>
    %49 = arith.addf %45, %48 : vector<8x1xf32>
    %50 = math.rsqrt %49 : vector<8x1xf32>
    %51 = vector.broadcast %50 : vector<8x1xf32> to vector<8x32xf32>
    %52 = arith.mulf %47, %51 : vector<8x32xf32>
    %53 = vector.broadcast %33 : vector<1x32xf32> to vector<8x32xf32>
    %54 = arith.mulf %52, %53 : vector<8x32xf32>
    %55 = vector.broadcast %34 : vector<1x32xf32> to vector<8x32xf32>
    %56 = arith.addf %54, %55 : vector<8x32xf32>
    %c0_20 = arith.constant 0 : index
    %c0_21 = arith.constant 0 : index
    %57 = vector.load %arg7[%c0_20, %c0_21] : memref<32x32xbf16, #tpu.memory_space<vmem>>, vector<32x32xbf16>
    %58 = arith.truncf %56 : vector<8x32xf32> to vector<8x32xbf16>
    %cst_22 = arith.constant dense<0.000000e+00> : vector<8x32xf32>
    %59 = tpu.matmul %58, %57, %cst_22 {dimension_numbers = #tpu.dot_dimension_numbers<[1], [0], [0], [1], [0, 0, 1, 1], [], []>} : vector<8x32xbf16>, vector<32x32xbf16>, vector<8x32xf32> -> vector<8x32xf32>
    %c5 = arith.constant 5 : index
    %c0_23 = arith.constant 0 : index
    %60 = vector.load %arg5[%c5, %c0_23] : memref<13x256xf32, #tpu.memory_space<vmem>>, vector<1x32xf32>
    %61 = vector.broadcast %60 : vector<1x32xf32> to vector<8x32xf32>
    %62 = arith.addf %59, %61 : vector<8x32xf32>
    %cst_24 = arith.constant 0.000000e+00 : f32
    %63 = vector.broadcast %cst_24 : f32 to vector<8x32xf32>
    %64 = arith.maximumf %62, %63 : vector<8x32xf32>
    %c6 = arith.constant 6 : index
    %c0_25 = arith.constant 0 : index
    %65 = vector.load %arg5[%c6, %c0_25] : memref<13x256xf32, #tpu.memory_space<vmem>>, vector<1x32xf32>
    %c7 = arith.constant 7 : index
    %c0_26 = arith.constant 0 : index
    %66 = vector.load %arg5[%c7, %c0_26] : memref<13x256xf32, #tpu.memory_space<vmem>>, vector<1x32xf32>
    %cst_27 = arith.constant dense<0.000000e+00> : vector<8xf32>
    %67 = vector.multi_reduction <add>, %64, %cst_27 [1] : vector<8x32xf32> to vector<8xf32>
    %68 = vector.shape_cast %67 : vector<8xf32> to vector<8x1xf32>
    %cst_28 = arith.constant 3.200000e+01 : f32
    %69 = vector.broadcast %cst_28 : f32 to vector<8x1xf32>
    %70 = arith.divf %68, %69 : vector<8x1xf32>
    %71 = vector.broadcast %70 : vector<8x1xf32> to vector<8x32xf32>
    %72 = arith.subf %64, %71 : vector<8x32xf32>
    %73 = arith.mulf %72, %72 : vector<8x32xf32>
    %cst_29 = arith.constant dense<0.000000e+00> : vector<8xf32>
    %74 = vector.multi_reduction <add>, %73, %cst_29 [1] : vector<8x32xf32> to vector<8xf32>
    %75 = vector.shape_cast %74 : vector<8xf32> to vector<8x1xf32>
    %cst_30 = arith.constant 3.200000e+01 : f32
    %76 = vector.broadcast %cst_30 : f32 to vector<8x1xf32>
    %77 = arith.divf %75, %76 : vector<8x1xf32>
    %78 = vector.broadcast %70 : vector<8x1xf32> to vector<8x32xf32>
    %79 = arith.subf %64, %78 : vector<8x32xf32>
    %cst_31 = arith.constant 9.99999974E-6 : f32
    %80 = vector.broadcast %cst_31 : f32 to vector<8x1xf32>
    %81 = arith.addf %77, %80 : vector<8x1xf32>
    %82 = math.rsqrt %81 : vector<8x1xf32>
    %83 = vector.broadcast %82 : vector<8x1xf32> to vector<8x32xf32>
    %84 = arith.mulf %79, %83 : vector<8x32xf32>
    %85 = vector.broadcast %65 : vector<1x32xf32> to vector<8x32xf32>
    %86 = arith.mulf %84, %85 : vector<8x32xf32>
    %87 = vector.broadcast %66 : vector<1x32xf32> to vector<8x32xf32>
    %88 = arith.addf %86, %87 : vector<8x32xf32>
    %c0_32 = arith.constant 0 : index
    %c0_33 = arith.constant 0 : index
    %89 = vector.load %arg8[%c0_32, %c0_33] : memref<32x160xbf16, #tpu.memory_space<vmem>>, vector<32x160xbf16>
    %90 = arith.truncf %88 : vector<8x32xf32> to vector<8x32xbf16>
    %cst_34 = arith.constant dense<0.000000e+00> : vector<8x160xf32>
    %91 = tpu.matmul %90, %89, %cst_34 {dimension_numbers = #tpu.dot_dimension_numbers<[1], [0], [0], [1], [0, 0, 1, 1], [], []>} : vector<8x32xbf16>, vector<32x160xbf16>, vector<8x160xf32> -> vector<8x160xf32>
    %c8 = arith.constant 8 : index
    %c0_35 = arith.constant 0 : index
    %92 = vector.load %arg5[%c8, %c0_35] : memref<13x256xf32, #tpu.memory_space<vmem>>, vector<1x160xf32>
    %93 = vector.broadcast %92 : vector<1x160xf32> to vector<8x160xf32>
    %94 = arith.addf %91, %93 : vector<8x160xf32>
    %c0_36 = arith.constant 0 : index
    %c0_37 = arith.constant 0 : index
    %95 = vector.load %arg2[%c0_36, %c0_37] : memref<8x128xf32, #tpu.memory_space<vmem>>, vector<8x128xf32>
    %cst_38 = arith.constant 5.000000e-01 : f32
    %96 = vector.broadcast %cst_38 : f32 to vector<8x128xf32>
    %97 = arith.cmpf ogt, %95, %96 : vector<8x128xf32>
    %98 = vector.extract_strided_slice %94 {offsets = [0, 0], sizes = [8, 128], strides = [1, 1]} : vector<8x160xf32> to vector<8x128xf32>
    %cst_39 = arith.constant -1.000000e+10 : f32
    %99 = vector.broadcast %cst_39 : f32 to vector<8x128xf32>
    %100 = arith.select %97, %98, %99 : vector<8x128xi1>, vector<8x128xf32>
    %c0_40 = arith.constant 0 : index
    %c0_41 = arith.constant 0 : index
    %101 = vector.load %arg3[%c0_40, %c0_41] : memref<8x128xf32, #tpu.memory_space<vmem>>, vector<8x128xf32>
    %102 = arith.addf %100, %101 : vector<8x128xf32>
    %103 = tpu.reduce_index %102 {axis = 1 : i32, kind = #tpu.reduction_kind<arg_max>} : vector<8x128xf32> -> vector<8xi32>
    %104 = vector.shape_cast %103 : vector<8xi32> to vector<8x1xi32>
    %105 = vector.shape_cast %104 : vector<8x1xi32> to vector<8x1xi32>
    %106 = vector.broadcast %105 : vector<8x1xi32> to vector<8x128xi32>
    %c0_42 = arith.constant 0 : index
    %c0_43 = arith.constant 0 : index
    %107 = vector.load %arg14[%c0_42, %c0_43] : memref<8x128xi32, #tpu.memory_space<vmem>>, vector<8x128xi32>
    tpu.vector_store %arg14[%c0_42, %c0_43], %106 {strides = array<i32>} : memref<8x128xi32, #tpu.memory_space<vmem>>, vector<8x128xi32>,
    %108 = vector.extract_strided_slice %94 {offsets = [0, 128], sizes = [8, 32], strides = [1, 1]} : vector<8x160xf32> to vector<8x32xf32>
    %cst_44 = arith.constant 0.000000e+00 : f32
    %109 = vector.broadcast %cst_44 : f32 to vector<8x32xf32>
    %110 = arith.cmpf ogt, %108, %109 : vector<8x32xf32>
    %cst_45 = arith.constant 0.00999999977 : f32
    %111 = vector.broadcast %cst_45 : f32 to vector<8x32xf32>
    %112 = arith.mulf %111, %108 : vector<8x32xf32>
    %113 = arith.select %110, %108, %112 : vector<8x32xi1>, vector<8x32xf32>
    %c0_46 = arith.constant 0 : index
    %c0_47 = arith.constant 0 : index
    %114 = vector.load %arg9[%c0_46, %c0_47] : memref<32x32xbf16, #tpu.memory_space<vmem>>, vector<32x32xbf16>
    %115 = arith.truncf %113 : vector<8x32xf32> to vector<8x32xbf16>
    %cst_48 = arith.constant dense<0.000000e+00> : vector<8x32xf32>
    %116 = tpu.matmul %115, %114, %cst_48 {dimension_numbers = #tpu.dot_dimension_numbers<[1], [0], [0], [1], [0, 0, 1, 1], [], []>} : vector<8x32xbf16>, vector<32x32xbf16>, vector<8x32xf32> -> vector<8x32xf32>
    %c9 = arith.constant 9 : index
    %c0_49 = arith.constant 0 : index
    %117 = vector.load %arg5[%c9, %c0_49] : memref<13x256xf32, #tpu.memory_space<vmem>>, vector<1x32xf32>
    %118 = vector.broadcast %117 : vector<1x32xf32> to vector<8x32xf32>
    %119 = arith.addf %116, %118 : vector<8x32xf32>
    %c0_50 = arith.constant 0 : index
    %c0_51 = arith.constant 0 : index
    %120 = vector.load %arg10[%c0_50, %c0_51] : memref<32x32xbf16, #tpu.memory_space<vmem>>, vector<32x32xbf16>
    %121 = arith.truncf %113 : vector<8x32xf32> to vector<8x32xbf16>
    %cst_52 = arith.constant dense<0.000000e+00> : vector<8x32xf32>
    %122 = tpu.matmul %121, %120, %cst_52 {dimension_numbers = #tpu.dot_dimension_numbers<[1], [0], [0], [1], [0, 0, 1, 1], [], []>} : vector<8x32xbf16>, vector<32x32xbf16>, vector<8x32xf32> -> vector<8x32xf32>
    %c10 = arith.constant 10 : index
    %c0_53 = arith.constant 0 : index
    %123 = vector.load %arg5[%c10, %c0_53] : memref<13x256xf32, #tpu.memory_space<vmem>>, vector<1x32xf32>
    %124 = vector.broadcast %123 : vector<1x32xf32> to vector<8x32xf32>
    %125 = arith.addf %122, %124 : vector<8x32xf32>
    %126 = math.exp %125 : vector<8x32xf32>
    %cst_54 = arith.constant 1.000000e-01 : f32
    %127 = vector.broadcast %cst_54 : f32 to vector<8x32xf32>
    %128 = arith.maximumf %126, %127 : vector<8x32xf32>
    %129 = math.sqrt %128 : vector<8x32xf32>
    %c0_55 = arith.constant 0 : index
    %c0_56 = arith.constant 0 : index
    %130 = vector.load %arg4[%c0_55, %c0_56] : memref<8x32xf32, #tpu.memory_space<vmem>>, vector<8x32xf32>
    %131 = arith.mulf %129, %130 : vector<8x32xf32>
    %132 = arith.addf %119, %131 : vector<8x32xf32>
    %c0_57 = arith.constant 0 : index
    %c0_58 = arith.constant 0 : index
    %133 = vector.load %arg11[%c0_57, %c0_58] : memref<25x32xbf16, #tpu.memory_space<vmem>>, vector<25x32xbf16>
    %134 = arith.truncf %0 : vector<8x25xf32> to vector<8x25xbf16>
    %cst_59 = arith.constant dense<0.000000e+00> : vector<8x32xf32>
    %135 = tpu.matmul %134, %133, %cst_59 {dimension_numbers = #tpu.dot_dimension_numbers<[1], [0], [0], [1], [0, 0, 1, 1], [], []>} : vector<8x25xbf16>, vector<25x32xbf16>, vector<8x32xf32> -> vector<8x32xf32>
    %c0_60 = arith.constant 0 : index
    %c0_61 = arith.constant 0 : index
    %136 = vector.load %arg12[%c0_60, %c0_61] : memref<32x32xbf16, #tpu.memory_space<vmem>>, vector<32x32xbf16>
    %137 = arith.truncf %132 : vector<8x32xf32> to vector<8x32xbf16>
    %cst_62 = arith.constant dense<0.000000e+00> : vector<8x32xf32>
    %138 = tpu.matmul %137, %136, %cst_62 {dimension_numbers = #tpu.dot_dimension_numbers<[1], [0], [0], [1], [0, 0, 1, 1], [], []>} : vector<8x32xbf16>, vector<32x32xbf16>, vector<8x32xf32> -> vector<8x32xf32>
    %139 = arith.addf %135, %138 : vector<8x32xf32>
    %c11 = arith.constant 11 : index
    %c0_63 = arith.constant 0 : index
    %140 = vector.load %arg5[%c11, %c0_63] : memref<13x256xf32, #tpu.memory_space<vmem>>, vector<1x32xf32>
    %141 = vector.broadcast %140 : vector<1x32xf32> to vector<8x32xf32>
    %142 = arith.addf %139, %141 : vector<8x32xf32>
    %cst_64 = arith.constant 0.000000e+00 : f32
    %143 = vector.broadcast %cst_64 : f32 to vector<8x32xf32>
    %144 = arith.cmpf ogt, %142, %143 : vector<8x32xf32>
    %cst_65 = arith.constant 0.00999999977 : f32
    %145 = vector.broadcast %cst_65 : f32 to vector<8x32xf32>
    %146 = arith.mulf %145, %142 : vector<8x32xf32>
    %147 = arith.select %144, %142, %146 : vector<8x32xi1>, vector<8x32xf32>
    %c0_66 = arith.constant 0 : index
    %c0_67 = arith.constant 0 : index
    %148 = vector.load %arg13[%c0_66, %c0_67] : memref<32x128xbf16, #tpu.memory_space<vmem>>, vector<32x128xbf16>
    %149 = arith.truncf %147 : vector<8x32xf32> to vector<8x32xbf16>
    %cst_68 = arith.constant dense<0.000000e+00> : vector<8x128xf32>
    %150 = tpu.matmul %149, %148, %cst_68 {dimension_numbers = #tpu.dot_dimension_numbers<[1], [0], [0], [1], [0, 0, 1, 1], [], []>} : vector<8x32xbf16>, vector<32x128xbf16>, vector<8x128xf32> -> vector<8x128xf32>
    %c12 = arith.constant 12 : index
    %c0_69 = arith.constant 0 : index
    %151 = vector.load %arg5[%c12, %c0_69] : memref<13x256xf32, #tpu.memory_space<vmem>>, vector<1x128xf32>
    %152 = vector.broadcast %151 : vector<1x128xf32> to vector<8x128xf32>
    %153 = arith.addf %150, %152 : vector<8x128xf32>
    %c0_70 = arith.constant 0 : index
    %c0_71 = arith.constant 0 : index
    %154 = vector.load %arg15[%c0_70, %c0_71] : memref<8x128xf32, #tpu.memory_space<vmem>>, vector<8x128xf32>
    tpu.vector_store %arg15[%c0_70, %c0_71], %153 {strides = array<i32>} : memref<8x128xf32, #tpu.memory_space<vmem>>, vector<8x128xf32>,
    return
  }
  func.func @transform_0(%arg0: i32) -> (i32, i32) {
    %c0_i32 = arith.constant 0 : i32
    %c0_i32_0 = arith.constant 0 : i32
    return %arg0, %c0_i32 : i32, i32
  }
  func.func @transform_1(%arg0: i32) -> (i32, i32) {
    %c0_i32 = arith.constant 0 : i32
    %c0_i32_0 = arith.constant 0 : i32
    return %arg0, %c0_i32 : i32, i32
  }
  func.func @transform_2(%arg0: i32) -> (i32, i32) {
    %c0_i32 = arith.constant 0 : i32
    %c0_i32_0 = arith.constant 0 : i32
    return %arg0, %c0_i32 : i32, i32
  }
  func.func @transform_3(%arg0: i32) -> (i32, i32) {
    %c0_i32 = arith.constant 0 : i32
    %c0_i32_0 = arith.constant 0 : i32
    return %arg0, %c0_i32 : i32, i32
  }
  func.func @transform_4(%arg0: i32) -> (i32, i32) {
    %c0_i32 = arith.constant 0 : i32
    %c0_i32_0 = arith.constant 0 : i32
    %c0_i32_1 = arith.constant 0 : i32
    return %c0_i32, %c0_i32_0 : i32, i32
  }
  func.func @transform_5(%arg0: i32) -> (i32, i32) {
    %c0_i32 = arith.constant 0 : i32
    %c0_i32_0 = arith.constant 0 : i32
    %c0_i32_1 = arith.constant 0 : i32
    return %c0_i32, %c0_i32_0 : i32, i32
  }
  func.func @transform_6(%arg0: i32) -> (i32, i32) {
    %c0_i32 = arith.constant 0 : i32
    %c0_i32_0 = arith.constant 0 : i32
    %c0_i32_1 = arith.constant 0 : i32
    return %c0_i32, %c0_i32_0 : i32, i32
  }
  func.func @transform_7(%arg0: i32) -> (i32, i32) {
    %c0_i32 = arith.constant 0 : i32
    %c0_i32_0 = arith.constant 0 : i32
    %c0_i32_1 = arith.constant 0 : i32
    return %c0_i32, %c0_i32_0 : i32, i32
  }
  func.func @transform_8(%arg0: i32) -> (i32, i32) {
    %c0_i32 = arith.constant 0 : i32
    %c0_i32_0 = arith.constant 0 : i32
    %c0_i32_1 = arith.constant 0 : i32
    return %c0_i32, %c0_i32_0 : i32, i32
  }
  func.func @transform_9(%arg0: i32) -> (i32, i32) {
    %c0_i32 = arith.constant 0 : i32
    %c0_i32_0 = arith.constant 0 : i32
    %c0_i32_1 = arith.constant 0 : i32
    return %c0_i32, %c0_i32_0 : i32, i32
  }
  func.func @transform_10(%arg0: i32) -> (i32, i32) {
    %c0_i32 = arith.constant 0 : i32
    %c0_i32_0 = arith.constant 0 : i32
    %c0_i32_1 = arith.constant 0 : i32
    return %c0_i32, %c0_i32_0 : i32, i32
  }
  func.func @transform_11(%arg0: i32) -> (i32, i32) {
    %c0_i32 = arith.constant 0 : i32
    %c0_i32_0 = arith.constant 0 : i32
    %c0_i32_1 = arith.constant 0 : i32
    return %c0_i32, %c0_i32_0 : i32, i32
  }
  func.func @transform_12(%arg0: i32) -> (i32, i32) {
    %c0_i32 = arith.constant 0 : i32
    %c0_i32_0 = arith.constant 0 : i32
    %c0_i32_1 = arith.constant 0 : i32
    return %c0_i32, %c0_i32_0 : i32, i32
  }
  func.func @transform_13(%arg0: i32) -> (i32, i32) {
    %c0_i32 = arith.constant 0 : i32
    %c0_i32_0 = arith.constant 0 : i32
    return %arg0, %c0_i32 : i32, i32
  }
  func.func @transform_14(%arg0: i32) -> (i32, i32) {
    %c0_i32 = arith.constant 0 : i32
    %c0_i32_0 = arith.constant 0 : i32
    return %arg0, %c0_i32 : i32, i32
  }
}

</mosaic_0001>

<llo_original>
// kernel: tpu_custom_call.1
$region0: #{tpu_custom_call.1}
  #allocation0 [shape = 'u32[]', space=smem, size = 0x4, offset = 0x4, fixed_abs, tag = 'smem constant byte address 0x4 - core index']
  #allocation1 [shape = 'u32[144,128]{1,0:T(1,128)}', space=vmem, size = 0x12000, scoped, tag = 'internal scratch']
  %s0 = inlined_call_operand.hbm [shape: f32[8,25], index: 0, kind: input, shape index: {}]
  %s1 = inlined_call_operand.hbm [shape: f32[8,128], index: 1, kind: input, shape index: {}]
  %s2 = inlined_call_operand.hbm [shape: f32[8,128], index: 2, kind: input, shape index: {}]
  %s3 = inlined_call_operand.hbm [shape: f32[8,32], index: 3, kind: input, shape index: {}]
  %s4 = inlined_call_operand.hbm [shape: f32[13,256], index: 4, kind: input, shape index: {}]
  %s5 = inlined_call_operand.hbm [shape: bf16[25,32], index: 5, kind: input, shape index: {}]
  %s6 = inlined_call_operand.hbm [shape: bf16[32,32], index: 6, kind: input, shape index: {}]
  %s7 = inlined_call_operand.hbm [shape: bf16[32,160], index: 7, kind: input, shape index: {}]
  %s8 = inlined_call_operand.hbm [shape: bf16[32,32], index: 8, kind: input, shape index: {}]
  %s9 = inlined_call_operand.vmem [shape: bf16[32,32], index: 9, kind: input, shape index: {}]
  %s10 = inlined_call_operand.hbm [shape: bf16[25,32], index: 10, kind: input, shape index: {}]
  %s11 = inlined_call_operand.hbm [shape: bf16[32,32], index: 11, kind: input, shape index: {}]
  %s12 = inlined_call_operand.hbm [shape: bf16[32,128], index: 12, kind: input, shape index: {}]
  %s13 = inlined_call_operand.hbm [shape: s32[8,128], index: 13, kind: output, shape index: {0}]
  %s14 = inlined_call_operand.hbm [shape: f32[8,128], index: 14, kind: output, shape index: {1}]
  %15 = xla_tuple %s13, %s14
  %s16 = sld [smem:[#allocation0]]
  $region118: #{tpu_custom_call.1} parent=0
    _
  %s18 = ssub.s32 1, %s16
  %s19 = scalar_select 0, %s18, %s16
  $region1: #{tpu_custom_call.1} parent=0
    #allocation2 [shape = 'u8[4096]{0}', space=vmem, size = 0x1000, scoped, tag = 'input window, operand 0, single buffered']
    #allocation3 [shape = 's32[1]{0}', space=sflag, size = 0x4, scoped, tag = 'scoped memory for tpu_custom_call.1']
    #allocation4 [shape = 's32[1]{0}', space=sflag, size = 0x4, scoped, tag = 'scoped memory for tpu_custom_call.1']
    #allocation5 [shape = 'u8[4096]{0}', space=vmem, size = 0x1000, scoped, tag = 'input window, operand 1, single buffered']
    #allocation6 [shape = 's32[1]{0}', space=sflag, size = 0x4, scoped, tag = 'scoped memory for tpu_custom_call.1']
    #allocation7 [shape = 'u8[4096]{0}', space=vmem, size = 0x1000, scoped, tag = 'input window, operand 2, single buffered']
    #allocation8 [shape = 'u8[4096]{0}', space=vmem, size = 0x1000, scoped, tag = 'input window, operand 3, single buffered']
    #allocation9 [shape = 's32[1]{0}', space=sflag, size = 0x4, scoped, tag = 'scoped memory for tpu_custom_call.1']
    #allocation10 [shape = 'u8[16384]{0}', space=vmem, size = 0x4000, scoped, tag = 'input window, operand 4, single buffered']
    #allocation11 [shape = 'u8[8192]{0}', space=vmem, size = 0x2000, scoped, tag = 'input window, operand 5, single buffered']
    #allocation12 [shape = 's32[1]{0}', space=sflag, size = 0x4, scoped, tag = 'scoped memory for tpu_custom_call.1']
    #allocation13 [shape = 'u8[8192]{0}', space=vmem, size = 0x2000, scoped, tag = 'input window, operand 6, single buffered']
    #allocation14 [shape = 'u8[16384]{0}', space=vmem, size = 0x4000, scoped, tag = 'input window, operand 7, single buffered']
    #allocation15 [shape = 's32[1]{0}', space=sflag, size = 0x4, scoped, tag = 'scoped memory for tpu_custom_call.1']
    #allocation16 [shape = 'u8[8192]{0}', space=vmem, size = 0x2000, scoped, tag = 'input window, operand 8, single buffered']
    #allocation17 [shape = 'u8[8192]{0}', space=vmem, size = 0x2000, scoped, tag = 'input window, operand 10, single buffered']
    #allocation18 [shape = 's32[1]{0}', space=sflag, size = 0x4, scoped, tag = 'scoped memory for tpu_custom_call.1']
    #allocation19 [shape = 'u8[8192]{0}', space=vmem, size = 0x2000, scoped, tag = 'input window, operand 11, single buffered']
    #allocation20 [shape = 'u8[8192]{0}', space=vmem, size = 0x2000, scoped, tag = 'input window, operand 12, single buffered']
    #allocation21 [shape = 's32[1]{0}', space=sflag, size = 0x4, scoped, tag = 'scoped memory for tpu_custom_call.1']
    #allocation22 [shape = 'u8[4096]{0}', space=vmem, size = 0x1000, scoped, tag = 'output window, operand 0, single buffered']
    #allocation23 [shape = 'u8[4096]{0}', space=vmem, size = 0x1000, scoped, tag = 'output window, operand 1, single buffered']
    #allocation24 [shape = 's32[1]{0}', space=sflag, size = 0x4, scoped, tag = 'scoped memory for tpu_custom_call.1']
    %20 = vsyncpa [#allocation3], 0
    %21 = vsyncpa [#allocation6], 0
    %22 = vsyncpa [#allocation9], 0
    %23 = vsyncpa [#allocation12], 0
    %24 = vsyncpa [#allocation15], 0
    %25 = vsyncpa [#allocation18], 0
    %26 = vsyncpa [#allocation21], 0
    %27 = vsyncpa [#allocation4], 0
    %28 = vsyncpa [#allocation24], 0
    // Predicated region
    $region2: #{tpu_custom_call.1} parent=1 // pred_check
      _
    $region3: #{tpu_custom_call.1} parent=1 // pred_check_branch
      %30 = sbr.rel (0) target = $region5
    $region4: #{tpu_custom_call.1} parent=1 // pred_region
      %s32 = ssub.s32 128, 128
      %33 = vsyncadd [#allocation3], %s32
      %s35 = sshll.u32 [#allocation2], 4
      %s36 = int_to_ptr.vmem [resolvable:$true] %s35
      %38 = dma.hbm_to_vmem [thread:$0]  %s0, 128, %s36, [#allocation3]
    $region5: #{tpu_custom_call.1} parent=1 // pred_fallthru
      _
    // Predicated region
    $region6: #{tpu_custom_call.1} parent=1 // pred_check
      _
    $region7: #{tpu_custom_call.1} parent=1 // pred_check_branch
      %40 = sbr.rel (0) target = $region9
    $region8: #{tpu_custom_call.1} parent=1 // pred_region
      %s42 = ssub.s32 128, 128
      %43 = vsyncadd [#allocation6], %s42
      %s45 = sshll.u32 [#allocation5], 4
      %s46 = int_to_ptr.vmem [resolvable:$true] %s45
      %48 = dma.hbm_to_vmem [thread:$0]  %s1, 128, %s46, [#allocation6]
    $region9: #{tpu_custom_call.1} parent=1 // pred_fallthru
      _
    // Predicated region
    $region10: #{tpu_custom_call.1} parent=1 // pred_check
      _
    $region11: #{tpu_custom_call.1} parent=1 // pred_check_branch
      %50 = sbr.rel (0) target = $region13
    $region12: #{tpu_custom_call.1} parent=1 // pred_region
      %s52 = ssub.s32 128, 128
      %53 = vsyncadd [#allocation6], %s52
      %s55 = sshll.u32 [#allocation7], 4
      %s56 = int_to_ptr.vmem [resolvable:$true] %s55
      %58 = dma.hbm_to_vmem [thread:$0]  %s2, 128, %s56, [#allocation6]
    $region13: #{tpu_custom_call.1} parent=1 // pred_fallthru
      _
    // Predicated region
    $region14: #{tpu_custom_call.1} parent=1 // pred_check
      _
    $region15: #{tpu_custom_call.1} parent=1 // pred_check_branch
      %60 = sbr.rel (0) target = $region17
    $region16: #{tpu_custom_call.1} parent=1 // pred_region
      %s62 = ssub.s32 128, 128
      %63 = vsyncadd [#allocation9], %s62
      %s65 = sshll.u32 [#allocation8], 4
      %s66 = int_to_ptr.vmem [resolvable:$true] %s65
      %68 = dma.hbm_to_vmem [thread:$0]  %s3, 128, %s66, [#allocation9]
    $region17: #{tpu_custom_call.1} parent=1 // pred_fallthru
      _
    // Predicated region
    $region18: #{tpu_custom_call.1} parent=1 // pred_check
      _
    $region19: #{tpu_custom_call.1} parent=1 // pred_check_branch
      %70 = sbr.rel (0) target = $region21
    $region20: #{tpu_custom_call.1} parent=1 // pred_region
      %s72 = ssub.s32 512, 512
      %73 = vsyncadd [#allocation9], %s72
      %s74 = sshll.u32 [#allocation10], 4
      %s75 = int_to_ptr.vmem [resolvable:$true] %s74
      %80 = dma.hbm_to_vmem [thread:$0]  %s4, 512, %s75, [#allocation9], 256, 256, 16
    $region21: #{tpu_custom_call.1} parent=1 // pred_fallthru
      _
    // Predicated region
    $region22: #{tpu_custom_call.1} parent=1 // pred_check
      _
    $region23: #{tpu_custom_call.1} parent=1 // pred_check_branch
      %82 = sbr.rel (0) target = $region25
    $region24: #{tpu_custom_call.1} parent=1 // pred_region
      %s84 = ssub.s32 256, 256
      %85 = vsyncadd [#allocation12], %s84
      %s86 = sshll.u32 [#allocation11], 4
      %s87 = int_to_ptr.vmem [resolvable:$true] %s86
      %92 = dma.hbm_to_vmem [thread:$0]  %s5, 256, %s87, [#allocation12], 64, 64, 4
    $region25: #{tpu_custom_call.1} parent=1 // pred_fallthru
      _
    // Predicated region
    $region26: #{tpu_custom_call.1} parent=1 // pred_check
      _
    $region27: #{tpu_custom_call.1} parent=1 // pred_check_branch
      %94 = sbr.rel (0) target = $region29
    $region28: #{tpu_custom_call.1} parent=1 // pred_region
      %s96 = ssub.s32 256, 256
      %97 = vsyncadd [#allocation12], %s96
      %s98 = sshll.u32 [#allocation13], 4
      %s99 = int_to_ptr.vmem [resolvable:$true] %s98
      %104 = dma.hbm_to_vmem [thread:$0]  %s6, 256, %s99, [#allocation12], 64, 64, 4
    $region29: #{tpu_custom_call.1} parent=1 // pred_fallthru
      _
    // Predicated region
    $region30: #{tpu_custom_call.1} parent=1 // pred_check
      _
    $region31: #{tpu_custom_call.1} parent=1 // pred_check_branch
      %106 = sbr.rel (0) target = $region33
    $region32: #{tpu_custom_call.1} parent=1 // pred_region
      %s108 = ssub.s32 512, 512
      %109 = vsyncadd [#allocation15], %s108
      %s110 = sshll.u32 [#allocation14], 4
      %s111 = int_to_ptr.vmem [resolvable:$true] %s110
      %116 = dma.hbm_to_vmem [thread:$0]  %s7, 512, %s111, [#allocation15], 128, 128, 8
    $region33: #{tpu_custom_call.1} parent=1 // pred_fallthru
      _
    // Predicated region
    $region34: #{tpu_custom_call.1} parent=1 // pred_check
      _
    $region35: #{tpu_custom_call.1} parent=1 // pred_check_branch
      %118 = sbr.rel (0) target = $region37
    $region36: #{tpu_custom_call.1} parent=1 // pred_region
      %s120 = ssub.s32 256, 256
      %121 = vsyncadd [#allocation15], %s120
      %s122 = sshll.u32 [#allocation16], 4
      %s123 = int_to_ptr.vmem [resolvable:$true] %s122
      %128 = dma.hbm_to_vmem [thread:$0]  %s8, 256, %s123, [#allocation15], 64, 64, 4
    $region37: #{tpu_custom_call.1} parent=1 // pred_fallthru
      _
    // Predicated region
    $region38: #{tpu_custom_call.1} parent=1 // pred_check
      _
    $region39: #{tpu_custom_call.1} parent=1 // pred_check_branch
      %130 = sbr.rel (0) target = $region41
    $region40: #{tpu_custom_call.1} parent=1 // pred_region
      _
    $region41: #{tpu_custom_call.1} parent=1 // pred_fallthru
      _
    // Predicated region
    $region42: #{tpu_custom_call.1} parent=1 // pred_check
      _
    $region43: #{tpu_custom_call.1} parent=1 // pred_check_branch
      %132 = sbr.rel (0) target = $region45
    $region44: #{tpu_custom_call.1} parent=1 // pred_region
      %s134 = ssub.s32 256, 256
      %135 = vsyncadd [#allocation18], %s134
      %s136 = sshll.u32 [#allocation17], 4
      %s137 = int_to_ptr.vmem [resolvable:$true] %s136
      %142 = dma.hbm_to_vmem [thread:$0]  %s10, 256, %s137, [#allocation18], 64, 64, 4
    $region45: #{tpu_custom_call.1} parent=1 // pred_fallthru
      _
    // Predicated region
    $region46: #{tpu_custom_call.1} parent=1 // pred_check
      _
    $region47: #{tpu_custom_call.1} parent=1 // pred_check_branch
      %144 = sbr.rel (0) target = $region49
    $region48: #{tpu_custom_call.1} parent=1 // pred_region
      %s146 = ssub.s32 256, 256
      %147 = vsyncadd [#allocation18], %s146
      %s148 = sshll.u32 [#allocation19], 4
      %s149 = int_to_ptr.vmem [resolvable:$true] %s148
      %154 = dma.hbm_to_vmem [thread:$0]  %s11, 256, %s149, [#allocation18], 64, 64, 4
    $region49: #{tpu_custom_call.1} parent=1 // pred_fallthru
      _
    // Predicated region
    $region50: #{tpu_custom_call.1} parent=1 // pred_check
      _
    $region51: #{tpu_custom_call.1} parent=1 // pred_check_branch
      %156 = sbr.rel (0) target = $region53
    $region52: #{tpu_custom_call.1} parent=1 // pred_region
      %s158 = ssub.s32 256, 256
      %159 = vsyncadd [#allocation21], %s158
      %s160 = sshll.u32 [#allocation20], 4
      %s161 = int_to_ptr.vmem [resolvable:$true] %s160
      %166 = dma.hbm_to_vmem [thread:$0]  %s12, 256, %s161, [#allocation21], 64, 64, 4
    $region53: #{tpu_custom_call.1} parent=1 // pred_fallthru
      _
    // Predicated region
    $region54: #{tpu_custom_call.1} parent=1 // pred_check
      _
    $region55: #{tpu_custom_call.1} parent=1 // pred_check_branch
      %168 = sbr.rel (0) target = $region57
    $region56: #{tpu_custom_call.1} parent=1 // pred_region
      %169 = dma.done [#allocation3], 128
    $region57: #{tpu_custom_call.1} parent=1 // pred_fallthru
      _
    // Predicated region
    $region58: #{tpu_custom_call.1} parent=1 // pred_check
      _
    $region59: #{tpu_custom_call.1} parent=1 // pred_check_branch
      %171 = sbr.rel (0) target = $region61
    $region60: #{tpu_custom_call.1} parent=1 // pred_region
      %172 = dma.done [#allocation6], 128
    $region61: #{tpu_custom_call.1} parent=1 // pred_fallthru
      _
    // Predicated region
    $region62: #{tpu_custom_call.1} parent=1 // pred_check
      _
    $region63: #{tpu_custom_call.1} parent=1 // pred_check_branch
      %174 = sbr.rel (0) target = $region65
    $region64: #{tpu_custom_call.1} parent=1 // pred_region
      %175 = dma.done [#allocation6], 128
    $region65: #{tpu_custom_call.1} parent=1 // pred_fallthru
      _
    // Predicated region
    $region66: #{tpu_custom_call.1} parent=1 // pred_check
      _
    $region67: #{tpu_custom_call.1} parent=1 // pred_check_branch
      %177 = sbr.rel (0) target = $region69
    $region68: #{tpu_custom_call.1} parent=1 // pred_region
      %178 = dma.done [#allocation9], 128
    $region69: #{tpu_custom_call.1} parent=1 // pred_fallthru
      _
    // Predicated region
    $region70: #{tpu_custom_call.1} parent=1 // pred_check
      _
    $region71: #{tpu_custom_call.1} parent=1 // pred_check_branch
      %180 = sbr.rel (0) target = $region73
    $region72: #{tpu_custom_call.1} parent=1 // pred_region
      %181 = dma.done [#allocation9], 512
    $region73: #{tpu_custom_call.1} parent=1 // pred_fallthru
      _
    // Predicated region
    $region74: #{tpu_custom_call.1} parent=1 // pred_check
      _
    $region75: #{tpu_custom_call.1} parent=1 // pred_check_branch
      %183 = sbr.rel (0) target = $region77
    $region76: #{tpu_custom_call.1} parent=1 // pred_region
      %184 = dma.done [#allocation12], 256
    $region77: #{tpu_custom_call.1} parent=1 // pred_fallthru
      _
    // Predicated region
    $region78: #{tpu_custom_call.1} parent=1 // pred_check
      _
    $region79: #{tpu_custom_call.1} parent=1 // pred_check_branch
      %186 = sbr.rel (0) target = $region81
    $region80: #{tpu_custom_call.1} parent=1 // pred_region
      %187 = dma.done [#allocation12], 256
    $region81: #{tpu_custom_call.1} parent=1 // pred_fallthru
      _
    // Predicated region
    $region82: #{tpu_custom_call.1} parent=1 // pred_check
      _
    $region83: #{tpu_custom_call.1} parent=1 // pred_check_branch
      %189 = sbr.rel (0) target = $region85
    $region84: #{tpu_custom_call.1} parent=1 // pred_region
      %190 = dma.done [#allocation15], 512
    $region85: #{tpu_custom_call.1} parent=1 // pred_fallthru
      _
    // Predicated region
    $region86: #{tpu_custom_call.1} parent=1 // pred_check
      _
    $region87: #{tpu_custom_call.1} parent=1 // pred_check_branch
      %192 = sbr.rel (0) target = $region89
    $region88: #{tpu_custom_call.1} parent=1 // pred_region
      %193 = dma.done [#allocation15], 256
    $region89: #{tpu_custom_call.1} parent=1 // pred_fallthru
      _
    // Predicated region
    $region90: #{tpu_custom_call.1} parent=1 // pred_check
      _
    $region91: #{tpu_custom_call.1} parent=1 // pred_check_branch
      %195 = sbr.rel (0) target = $region93
    $region92: #{tpu_custom_call.1} parent=1 // pred_region
      %196 = dma.done [#allocation18], 256
    $region93: #{tpu_custom_call.1} parent=1 // pred_fallthru
      _
    // Predicated region
    $region94: #{tpu_custom_call.1} parent=1 // pred_check
      _
    $region95: #{tpu_custom_call.1} parent=1 // pred_check_branch
      %198 = sbr.rel (0) target = $region97
    $region96: #{tpu_custom_call.1} parent=1 // pred_region
      %199 = dma.done [#allocation18], 256
    $region97: #{tpu_custom_call.1} parent=1 // pred_fallthru
      _
    // Predicated region
    $region98: #{tpu_custom_call.1} parent=1 // pred_check
      _
    $region99: #{tpu_custom_call.1} parent=1 // pred_check_branch
      %201 = sbr.rel (0) target = $region101
    $region100: #{tpu_custom_call.1} parent=1 // pred_region
      %202 = dma.done [#allocation21], 256
    $region101: #{tpu_custom_call.1} parent=1 // pred_fallthru
      _
    %v204 = vld [vmem:[#allocation2] sm:$0xff]
    %v205 = vld [vmem:[#allocation10] ss:$0 sm:$0xff]
    %v206 = vld [vmem:[#allocation10 + $0x1] ss:$0 sm:$0xff]
    %vm207 = vcmask 203776
    %v208 = vsel %vm207, %v204, 0.0
    %209 = vadd.xlane.f32.xlu0 %v208
    %v210 = vpop.xlane.xlu0 %209
    %v211 = vrcp.pop 25.0
    %v212 = vmul.f32 %v210, %v211
    %v213 = vsub.f32 %v204, %v212
    %v214 = vmul.f32 %v213, %v213
    %v215 = vsel %vm207, %v214, 0.0
    %216 = vadd.xlane.f32.xlu0 %v215
    %v217 = vpop.xlane.xlu0 %216
    %v218 = vmul.f32 %v217, %v211
    %v219 = vadd.f32 %v218, 1e-05
    %v220 = vrsqrt.pop %v219
    %v221 = vmul.f32 %v213, %v220
    %v222 = vmul.f32 %v221, %v205
    %v223 = vadd.f32 %v222, %v206
    %v224 = vld [vmem:[#allocation11] sm:$0xf]
    %v225 = vld [vmem:[#allocation11 + $0x4] sm:$0xf]
    %v226 = vld [vmem:[#allocation11 + $0x8] sm:$0xf]
    %v227 = vld [vmem:[#allocation11 + $0xc] sm:$0x1]
    %v228 = vpack.c.bf16 %v223, %v223
    %v229 = vld [vmem:[#allocation10 + $0x2] ss:$0 sm:$0xff]
    %v234 = vunpack.c.l.b16 %v224
    %v235 = vunpack.c.l.b16 %v225
    %v236 = vunpack.c.l.b16 %v226
    %v237 = vunpack.c.l.b16 %v227
    %v238 = vpack.c.b16 %v235, %v234
    %v239 = vpack.c.b16 %v237, %v236
    %v242 = vsel %vm207, %v228, 0
    %vm244 = vcmask 1043456
    %vm245 = vcmask 1044480
    %v246 = vsel %vm244, 4294967295, 65535
    %v247 = vsel %vm245, %v246, 0
    %v249 = vand.u32 %v239, %v247
    %251 = vmatprep.subr.bf16.mxu0 0
    %252 = vmatpush1.bf16.msra.mxu0 0
    %253 = vmatprep.subr.bf16.mxu0 0
    %254 = vmatpush1.bf16.msra.mxu0 0
    %255 = vmatprep.subr.bf16.mxu0 0
    %256 = vmatpush1.bf16.msra.mxu0 0
    %257 = vmatprep.subr.bf16.mxu0 0
    %258 = vmatpush1.bf16.msra.mxu0 0
    %259 = vmatprep.subr.bf16.mxu0 0
    %260 = vmatpush1.bf16.msra.mxu0 0
    %261 = vmatprep.subr.bf16.mxu0 0
    %262 = vmatpush1.bf16.msra.mxu0 0
    %263 = vmatprep.subr.bf16.mxu0 0
    %264 = vmatpush1.bf16.msra.mxu0 %v249
    %265 = vmatprep.subr.bf16.mxu0 0
    %266 = vmatpush1.bf16.msra.mxu0 %v238
    %267 = vmatprep.subr.bf16.mxu0 0
    %268 = vmatpush2.bf16.msra.mxu0 0
    %269 = vmatprep.subr.bf16.mxu0 0
    %270 = vmatpush2.bf16.msra.mxu0 0
    %271 = vmatprep.subr.bf16.mxu0 0
    %272 = vmatpush2.bf16.msra.mxu0 0
    %273 = vmatprep.subr.bf16.mxu0 0
    %274 = vmatpush2.bf16.msra.mxu0 0
    %275 = vmatprep.subr.bf16.mxu0 0
    %276 = vmatpush2.bf16.msra.mxu0 0
    %277 = vmatprep.subr.bf16.mxu0 0
    %278 = vmatpush2.bf16.msra.mxu0 0
    %279 = vmatprep.subr.bf16.mxu0 0
    %280 = vmatpush2.bf16.msra.mxu0 0
    %281 = vmatprep.subr.bf16.mxu0 0
    %282 = vmatpush2.bf16.msra.mxu0 0
    %283 = vmatprep.mubr.bf16.mxu0 0
    %284 = vmatmul.mubr.bf16.gmra.mxu0 %v242
    %v285 = vpop.f32.mrf.mxu0
    %v286 = vadd.f32 %v229, %v285
    %v287 = vpop.f32.mrf.mxu0
    %v288 = vpop.f32.mrf.mxu0
    %v289 = vpop.f32.mrf.mxu0
    %290 = vdwg.mxu0
    %v291 = vmax.f32 %v286, 0.0
    %v292 = vld [vmem:[#allocation10 + $0x3] ss:$0 sm:$0xff]
    %v293 = vld [vmem:[#allocation10 + $0x4] ss:$0 sm:$0xff]
    %vm294 = vcmask 261120
    %v295 = vsel %vm294, %v291, 0.0
    %296 = vadd.xlane.f32.xlu0 %v295
    %v297 = vpop.xlane.xlu0 %296
    %v298 = vrcp.pop 32.0
    %v299 = vmul.f32 %v297, %v298
    %v300 = vsub.f32 %v291, %v299
    %v301 = vmul.f32 %v300, %v300
    %v302 = vsel %vm294, %v301, 0.0
    %303 = vadd.xlane.f32.xlu0 %v302
    %v304 = vpop.xlane.xlu0 %303
    %v305 = vmul.f32 %v304, %v298
    %v306 = vadd.f32 %v305, 1e-05
    %v307 = vrsqrt.pop %v306
    %v308 = vmul.f32 %v300, %v307
    %v309 = vmul.f32 %v308, %v292
    %v310 = vadd.f32 %v309, %v293
    %v311 = vld [vmem:[#allocation13] sm:$0xf]
    %v312 = vld [vmem:[#allocation13 + $0x4] sm:$0xf]
    %v313 = vld [vmem:[#allocation13 + $0x8] sm:$0xf]
    %v314 = vld [vmem:[#allocation13 + $0xc] sm:$0xf]
    %v315 = vpack.c.bf16 %v310, %v310
    %v316 = vld [vmem:[#allocation10 + $0x5] ss:$0 sm:$0xff]
    %v321 = vunpack.c.l.b16 %v311
    %v322 = vunpack.c.l.b16 %v312
    %v323 = vunpack.c.l.b16 %v313
    %v324 = vunpack.c.l.b16 %v314
    %v325 = vpack.c.b16 %v322, %v321
    %v326 = vpack.c.b16 %v324, %v323
    %v330 = vsel %vm294, %v315, 0
    %332 = vmatprep.subr.bf16.mxu0 0
    %333 = vmatpush1.bf16.msra.mxu0 0
    %334 = vmatprep.subr.bf16.mxu0 0
    %335 = vmatpush1.bf16.msra.mxu0 0
    %336 = vmatprep.subr.bf16.mxu0 0
    %337 = vmatpush1.bf16.msra.mxu0 0
    %338 = vmatprep.subr.bf16.mxu0 0
    %339 = vmatpush1.bf16.msra.mxu0 0
    %340 = vmatprep.subr.bf16.mxu0 0
    %341 = vmatpush1.bf16.msra.mxu0 0
    %342 = vmatprep.subr.bf16.mxu0 0
    %343 = vmatpush1.bf16.msra.mxu0 0
    %344 = vmatprep.subr.bf16.mxu0 0
    %345 = vmatpush1.bf16.msra.mxu0 %v326
    %346 = vmatprep.subr.bf16.mxu0 0
    %347 = vmatpush1.bf16.msra.mxu0 %v325
    %348 = vmatprep.subr.bf16.mxu0 0
    %349 = vmatpush2.bf16.msra.mxu0 0
    %350 = vmatprep.subr.bf16.mxu0 0
    %351 = vmatpush2.bf16.msra.mxu0 0
    %352 = vmatprep.subr.bf16.mxu0 0
    %353 = vmatpush2.bf16.msra.mxu0 0
    %354 = vmatprep.subr.bf16.mxu0 0
    %355 = vmatpush2.bf16.msra.mxu0 0
    %356 = vmatprep.subr.bf16.mxu0 0
    %357 = vmatpush2.bf16.msra.mxu0 0
    %358 = vmatprep.subr.bf16.mxu0 0
    %359 = vmatpush2.bf16.msra.mxu0 0
    %360 = vmatprep.subr.bf16.mxu0 0
    %361 = vmatpush2.bf16.msra.mxu0 0
    %362 = vmatprep.subr.bf16.mxu0 0
    %363 = vmatpush2.bf16.msra.mxu0 0
    %364 = vmatprep.mubr.bf16.mxu0 0
    %365 = vmatmul.mubr.bf16.gmra.mxu0 %v330
    %v366 = vpop.f32.mrf.mxu0
    %v367 = vadd.f32 %v316, %v366
    %v368 = vpop.f32.mrf.mxu0
    %v369 = vpop.f32.mrf.mxu0
    %v370 = vpop.f32.mrf.mxu0
    %371 = vdwg.mxu0
    %v372 = vmax.f32 %v367, 0.0
    %v373 = vld [vmem:[#allocation10 + $0x6] ss:$0 sm:$0xff]
    %v374 = vld [vmem:[#allocation10 + $0x7] ss:$0 sm:$0xff]
    %v375 = vsel %vm294, %v372, 0.0
    %376 = vadd.xlane.f32.xlu0 %v375
    %v377 = vpop.xlane.xlu0 %376
    %v378 = vmul.f32 %v377, %v298
    %v379 = vsub.f32 %v372, %v378
    %v380 = vmul.f32 %v379, %v379
    %v381 = vsel %vm294, %v380, 0.0
    %382 = vadd.xlane.f32.xlu0 %v381
    %v383 = vpop.xlane.xlu0 %382
    %v384 = vmul.f32 %v383, %v298
    %v385 = vadd.f32 %v384, 1e-05
    %v386 = vrsqrt.pop %v385
    %v387 = vmul.f32 %v379, %v386
    %v388 = vmul.f32 %v387, %v373
    %v389 = vadd.f32 %v388, %v374
    %v390 = vld [vmem:[#allocation14] sm:$0xff]
    %v391 = vld [vmem:[#allocation14 + $0x8] sm:$0xff]
    %v392 = vld [vmem:[#allocation14 + $0x10] sm:$0xff]
    %v393 = vld [vmem:[#allocation14 + $0x18] sm:$0xff]
    %v394 = vpack.c.bf16 %v389, %v389
    %s395 = scalar_lea.vmem [#allocation10], 16
    %v396 = vld [vmem:[%s395] ss:$8 sm:$0x3]
    %v398 = vlaneseq
    %v399 = vshrl.u32 %v398, 7
    %v400 = vsub.s32 0, %v399
    %v401 = vrot.slane %v396, %v400
    %v402 = vlaneseq
    %v403 = vshrl.u32 %v402, 7
    %v404 = vsub.s32 1, %v403
    %v405 = vrot.slane %v396, %v404
    %v412 = vunpack.c.l.b16 %v390
    %v413 = vunpack.c.h.b16 %v390
    %v414 = vunpack.c.l.b16 %v391
    %v415 = vunpack.c.h.b16 %v391
    %v416 = vunpack.c.l.b16 %v392
    %v417 = vunpack.c.h.b16 %v392
    %v418 = vunpack.c.l.b16 %v393
    %v419 = vunpack.c.h.b16 %v393
    %v420 = vpack.c.b16 %v414, %v412
    %v421 = vpack.c.b16 %v415, %v413
    %v422 = vpack.c.b16 %v418, %v416
    %v423 = vpack.c.b16 %v419, %v417
    %v429 = vsel %vm294, %v394, 0
    %431 = vmatprep.subr.bf16.mxu0 0
    %432 = vmatpush1.bf16.msra.mxu0 0
    %433 = vmatprep.subr.bf16.mxu0 0
    %434 = vmatpush1.bf16.msra.mxu0 0
    %435 = vmatprep.subr.bf16.mxu0 0
    %436 = vmatpush1.bf16.msra.mxu0 0
    %437 = vmatprep.subr.bf16.mxu0 0
    %438 = vmatpush1.bf16.msra.mxu0 0
    %439 = vmatprep.subr.bf16.mxu0 0
    %440 = vmatpush1.bf16.msra.mxu0 0
    %441 = vmatprep.subr.bf16.mxu0 0
    %442 = vmatpush1.bf16.msra.mxu0 0
    %443 = vmatprep.subr.bf16.mxu0 %v423
    %444 = vmatpush1.bf16.msra.mxu0 %v422
    %445 = vmatprep.subr.bf16.mxu0 %v421
    %446 = vmatpush1.bf16.msra.mxu0 %v420
    %447 = vmatprep.subr.bf16.mxu0 0
    %448 = vmatpush2.bf16.msra.mxu0 0
    %449 = vmatprep.subr.bf16.mxu0 0
    %450 = vmatpush2.bf16.msra.mxu0 0
    %451 = vmatprep.subr.bf16.mxu0 0
    %452 = vmatpush2.bf16.msra.mxu0 0
    %453 = vmatprep.subr.bf16.mxu0 0
    %454 = vmatpush2.bf16.msra.mxu0 0
    %455 = vmatprep.subr.bf16.mxu0 0
    %456 = vmatpush2.bf16.msra.mxu0 0
    %457 = vmatprep.subr.bf16.mxu0 0
    %458 = vmatpush2.bf16.msra.mxu0 0
    %459 = vmatprep.subr.bf16.mxu0 0
    %460 = vmatpush2.bf16.msra.mxu0 0
    %461 = vmatprep.subr.bf16.mxu0 0
    %462 = vmatpush2.bf16.msra.mxu0 0
    %463 = vmatprep.mubr.bf16.mxu0 0
    %464 = vmatmul.mubr.bf16.gmra.mxu0 %v429
    %v465 = vpop.f32.mrf.mxu0
    %v466 = vadd.f32 %v401, %v465
    %v467 = vpop.f32.mrf.mxu0
    %v468 = vadd.f32 %v405, %v467
    %v469 = vpop.f32.mrf.mxu0
    %v470 = vpop.f32.mrf.mxu0
    %471 = vdwg.mxu0
    %v472 = vld [vmem:[#allocation5] sm:$0xff]
    %vm473 = vcmp.gt.f32.partialorder %v472, 0.5
    %v474 = vsel %vm473, %v466, -1e+10
    %v475 = vld [vmem:[#allocation7] sm:$0xff]
    %v476 = vadd.f32 %v474, %v475
    %477 = vmax.index.xlane.f32.xlu0 %v476
    %v478 = vpop.xlane.xlu0 %477
    %479 = vst [vmem:[#allocation22] sm:$0xff] %v478
    %vm480 = vcmp.gt.f32.partialorder %v468, 0.0
    %v481 = vmul.f32 %v468, 0.01
    %v482 = vsel %vm480, %v468, %v481
    %v483 = vld [vmem:[#allocation16] sm:$0xf]
    %v484 = vld [vmem:[#allocation16 + $0x4] sm:$0xf]
    %v485 = vld [vmem:[#allocation16 + $0x8] sm:$0xf]
    %v486 = vld [vmem:[#allocation16 + $0xc] sm:$0xf]
    %v487 = vpack.c.bf16 %v482, %v482
    %v488 = vld [vmem:[#allocation10 + $0x11] ss:$0 sm:$0xff]
    %v493 = vunpack.c.l.b16 %v483
    %v494 = vunpack.c.l.b16 %v484
    %v495 = vunpack.c.l.b16 %v485
    %v496 = vunpack.c.l.b16 %v486
    %v497 = vpack.c.b16 %v494, %v493
    %v498 = vpack.c.b16 %v496, %v495
    %v502 = vsel %vm294, %v487, 0
    %504 = vmatprep.subr.bf16.mxu0 0
    %505 = vmatpush1.bf16.msra.mxu0 0
    %506 = vmatprep.subr.bf16.mxu0 0
    %507 = vmatpush1.bf16.msra.mxu0 0
    %508 = vmatprep.subr.bf16.mxu0 0
    %509 = vmatpush1.bf16.msra.mxu0 0
    %510 = vmatprep.subr.bf16.mxu0 0
    %511 = vmatpush1.bf16.msra.mxu0 0
    %512 = vmatprep.subr.bf16.mxu0 0
    %513 = vmatpush1.bf16.msra.mxu0 0
    %514 = vmatprep.subr.bf16.mxu0 0
    %515 = vmatpush1.bf16.msra.mxu0 0
    %516 = vmatprep.subr.bf16.mxu0 0
    %517 = vmatpush1.bf16.msra.mxu0 %v498
    %518 = vmatprep.subr.bf16.mxu0 0
    %519 = vmatpush1.bf16.msra.mxu0 %v497
    %520 = vmatprep.subr.bf16.mxu0 0
    %521 = vmatpush2.bf16.msra.mxu0 0
    %522 = vmatprep.subr.bf16.mxu0 0
    %523 = vmatpush2.bf16.msra.mxu0 0
    %524 = vmatprep.subr.bf16.mxu0 0
    %525 = vmatpush2.bf16.msra.mxu0 0
    %526 = vmatprep.subr.bf16.mxu0 0
    %527 = vmatpush2.bf16.msra.mxu0 0
    %528 = vmatprep.subr.bf16.mxu0 0
    %529 = vmatpush2.bf16.msra.mxu0 0
    %530 = vmatprep.subr.bf16.mxu0 0
    %531 = vmatpush2.bf16.msra.mxu0 0
    %532 = vmatprep.subr.bf16.mxu0 0
    %533 = vmatpush2.bf16.msra.mxu0 0
    %534 = vmatprep.subr.bf16.mxu0 0
    %535 = vmatpush2.bf16.msra.mxu0 0
    %536 = vmatprep.mubr.bf16.mxu0 0
    %537 = vmatmul.mubr.bf16.gmra.mxu0 %v502
    %v538 = vpop.f32.mrf.mxu0
    %v539 = vadd.f32 %v488, %v538
    %v540 = vpop.f32.mrf.mxu0
    %v541 = vpop.f32.mrf.mxu0
    %v542 = vpop.f32.mrf.mxu0
    %543 = vdwg.mxu0
    %v544 = vld [vmem:[%s9] sm:$0xf]
    %v545 = vld [vmem:[%s9 + $0x4] sm:$0xf]
    %v546 = vld [vmem:[%s9 + $0x8] sm:$0xf]
    %v547 = vld [vmem:[%s9 + $0xc] sm:$0xf]
    %v548 = vld [vmem:[#allocation10 + $0x12] ss:$0 sm:$0xff]
    %v553 = vunpack.c.l.b16 %v544
    %v554 = vunpack.c.l.b16 %v545
    %v555 = vunpack.c.l.b16 %v546
    %v556 = vunpack.c.l.b16 %v547
    %v557 = vpack.c.b16 %v554, %v553
    %v558 = vpack.c.b16 %v556, %v555
    %561 = vmatprep.subr.bf16.mxu0 0
    %562 = vmatpush1.bf16.msra.mxu0 0
    %563 = vmatprep.subr.bf16.mxu0 0
    %564 = vmatpush1.bf16.msra.mxu0 0
    %565 = vmatprep.subr.bf16.mxu0 0
    %566 = vmatpush1.bf16.msra.mxu0 0
    %567 = vmatprep.subr.bf16.mxu0 0
    %568 = vmatpush1.bf16.msra.mxu0 0
    %569 = vmatprep.subr.bf16.mxu0 0
    %570 = vmatpush1.bf16.msra.mxu0 0
    %571 = vmatprep.subr.bf16.mxu0 0
    %572 = vmatpush1.bf16.msra.mxu0 0
    %573 = vmatprep.subr.bf16.mxu0 0
    %574 = vmatpush1.bf16.msra.mxu0 %v558
    %575 = vmatprep.subr.bf16.mxu0 0
    %576 = vmatpush1.bf16.msra.mxu0 %v557
    %577 = vmatprep.subr.bf16.mxu0 0
    %578 = vmatpush2.bf16.msra.mxu0 0
    %579 = vmatprep.subr.bf16.mxu0 0
    %580 = vmatpush2.bf16.msra.mxu0 0
    %581 = vmatprep.subr.bf16.mxu0 0
    %582 = vmatpush2.bf16.msra.mxu0 0
    %583 = vmatprep.subr.bf16.mxu0 0
    %584 = vmatpush2.bf16.msra.mxu0 0
    %585 = vmatprep.subr.bf16.mxu0 0
    %586 = vmatpush2.bf16.msra.mxu0 0
    %587 = vmatprep.subr.bf16.mxu0 0
    %588 = vmatpush2.bf16.msra.mxu0 0
    %589 = vmatprep.subr.bf16.mxu0 0
    %590 = vmatpush2.bf16.msra.mxu0 0
    %591 = vmatprep.subr.bf16.mxu0 0
    %592 = vmatpush2.bf16.msra.mxu0 0
    %593 = vmatprep.mubr.bf16.mxu0 0
    %594 = vmatmul.mubr.bf16.gmra.mxu0 %v502
    %v595 = vpop.f32.mrf.mxu0
    %v596 = vadd.f32 %v548, %v595
    %v597 = vpop.f32.mrf.mxu0
    %v598 = vpop.f32.mrf.mxu0
    %v599 = vpop.f32.mrf.mxu0
    %600 = vdwg.mxu0
    %v601 = vmul.f32 %v596, 1.442695
    %v602 = vpow.pop %v601
    %v603 = vmax.f32 %v602, 0.1
    %v604 = vrsqrt.pop %v603
    %v605 = vmul.f32 %v603, %v604
    %vm606 = vcmp.eq.f32.partialorder %v603, inf
    %v607 = vsel %vm606, %v603, %v605
    %vm608 = vcmp.eq.f32.partialorder %v603, 0.0
    %v609 = vand.u32 %v603, 2147483648
    %v610 = vsel %vm608, %v609, %v607
    %v611 = vld [vmem:[#allocation8] sm:$0xff]
    %v612 = vmul.f32 %v610, %v611
    %v613 = vadd.f32 %v539, %v612
    %v614 = vld [vmem:[#allocation17] sm:$0xf]
    %v615 = vld [vmem:[#allocation17 + $0x4] sm:$0xf]
    %v616 = vld [vmem:[#allocation17 + $0x8] sm:$0xf]
    %v617 = vld [vmem:[#allocation17 + $0xc] sm:$0x1]
    %v618 = vpack.c.bf16 %v204, %v204
    %v619 = vld [vmem:[#allocation19] sm:$0xf]
    %v620 = vld [vmem:[#allocation19 + $0x4] sm:$0xf]
    %v621 = vld [vmem:[#allocation19 + $0x8] sm:$0xf]
    %v622 = vld [vmem:[#allocation19 + $0xc] sm:$0xf]
    %v623 = vpack.c.bf16 %v613, %v613
    %v628 = vunpack.c.l.b16 %v619
    %v629 = vunpack.c.l.b16 %v620
    %v630 = vunpack.c.l.b16 %v621
    %v631 = vunpack.c.l.b16 %v622
    %v632 = vpack.c.b16 %v629, %v628
    %v633 = vpack.c.b16 %v631, %v630
    %v637 = vsel %vm294, %v623, 0
    %639 = vmatprep.subr.bf16.mxu0 0
    %640 = vmatpush1.bf16.msra.mxu0 0
    %641 = vmatprep.subr.bf16.mxu0 0
    %642 = vmatpush1.bf16.msra.mxu0 0
    %643 = vmatprep.subr.bf16.mxu0 0
    %644 = vmatpush1.bf16.msra.mxu0 0
    %645 = vmatprep.subr.bf16.mxu0 0
    %646 = vmatpush1.bf16.msra.mxu0 0
    %647 = vmatprep.subr.bf16.mxu0 0
    %648 = vmatpush1.bf16.msra.mxu0 0
    %649 = vmatprep.subr.bf16.mxu0 0
    %650 = vmatpush1.bf16.msra.mxu0 0
    %651 = vmatprep.subr.bf16.mxu0 0
    %652 = vmatpush1.bf16.msra.mxu0 %v633
    %653 = vmatprep.subr.bf16.mxu0 0
    %654 = vmatpush1.bf16.msra.mxu0 %v632
    %655 = vmatprep.subr.bf16.mxu0 0
    %656 = vmatpush2.bf16.msra.mxu0 0
    %657 = vmatprep.subr.bf16.mxu0 0
    %658 = vmatpush2.bf16.msra.mxu0 0
    %659 = vmatprep.subr.bf16.mxu0 0
    %660 = vmatpush2.bf16.msra.mxu0 0
    %661 = vmatprep.subr.bf16.mxu0 0
    %662 = vmatpush2.bf16.msra.mxu0 0
    %663 = vmatprep.subr.bf16.mxu0 0
    %664 = vmatpush2.bf16.msra.mxu0 0
    %665 = vmatprep.subr.bf16.mxu0 0
    %666 = vmatpush2.bf16.msra.mxu0 0
    %667 = vmatprep.subr.bf16.mxu0 0
    %668 = vmatpush2.bf16.msra.mxu0 0
    %669 = vmatprep.subr.bf16.mxu0 0
    %670 = vmatpush2.bf16.msra.mxu0 0
    %671 = vmatprep.mubr.bf16.mxu0 0
    %672 = vmatmul.mubr.bf16.gmra.mxu0 %v637
    %v673 = vpop.f32.mrf.mxu0
    %v674 = vadd.f32 0.0, %v673
    %v675 = vpop.f32.mrf.mxu0
    %v676 = vpop.f32.mrf.mxu0
    %v677 = vpop.f32.mrf.mxu0
    %678 = vdwg.mxu0
    %v683 = vunpack.c.l.b16 %v614
    %v684 = vunpack.c.l.b16 %v615
    %v685 = vunpack.c.l.b16 %v616
    %v686 = vunpack.c.l.b16 %v617
    %v687 = vpack.c.b16 %v684, %v683
    %v688 = vpack.c.b16 %v686, %v685
    %v691 = vsel %vm207, %v618, 0
    %v694 = vand.u32 %v688, %v247
    %696 = vmatprep.subr.bf16.mxu0 0
    %697 = vmatpush1.bf16.msra.mxu0 0
    %698 = vmatprep.subr.bf16.mxu0 0
    %699 = vmatpush1.bf16.msra.mxu0 0
    %700 = vmatprep.subr.bf16.mxu0 0
    %701 = vmatpush1.bf16.msra.mxu0 0
    %702 = vmatprep.subr.bf16.mxu0 0
    %703 = vmatpush1.bf16.msra.mxu0 0
    %704 = vmatprep.subr.bf16.mxu0 0
    %705 = vmatpush1.bf16.msra.mxu0 0
    %706 = vmatprep.subr.bf16.mxu0 0
    %707 = vmatpush1.bf16.msra.mxu0 0
    %708 = vmatprep.subr.bf16.mxu0 0
    %709 = vmatpush1.bf16.msra.mxu0 %v694
    %710 = vmatprep.subr.bf16.mxu0 0
    %711 = vmatpush1.bf16.msra.mxu0 %v687
    %712 = vmatprep.subr.bf16.mxu0 0
    %713 = vmatpush2.bf16.msra.mxu0 0
    %714 = vmatprep.subr.bf16.mxu0 0
    %715 = vmatpush2.bf16.msra.mxu0 0
    %716 = vmatprep.subr.bf16.mxu0 0
    %717 = vmatpush2.bf16.msra.mxu0 0
    %718 = vmatprep.subr.bf16.mxu0 0
    %719 = vmatpush2.bf16.msra.mxu0 0
    %720 = vmatprep.subr.bf16.mxu0 0
    %721 = vmatpush2.bf16.msra.mxu0 0
    %722 = vmatprep.subr.bf16.mxu0 0
    %723 = vmatpush2.bf16.msra.mxu0 0
    %724 = vmatprep.subr.bf16.mxu0 0
    %725 = vmatpush2.bf16.msra.mxu0 0
    %726 = vmatprep.subr.bf16.mxu0 0
    %727 = vmatpush2.bf16.msra.mxu0 0
    %728 = vmatprep.mubr.bf16.mxu0 0
    %729 = vmatmul.mubr.bf16.gmra.mxu0 %v691
    %v730 = vpop.f32.mrf.mxu0
    %v731 = vadd.f32 %v674, %v730
    %v732 = vpop.f32.mrf.mxu0
    %v733 = vpop.f32.mrf.mxu0
    %v734 = vpop.f32.mrf.mxu0
    %735 = vdwg.mxu0
    %v736 = vld [vmem:[#allocation10 + $0x13] ss:$0 sm:$0xff]
    %v737 = vadd.f32 %v731, %v736
    %vm738 = vcmp.gt.f32.partialorder %v737, 0.0
    %v739 = vmul.f32 %v737, 0.01
    %v740 = vsel %vm738, %v737, %v739
    %v741 = vld [vmem:[#allocation20] sm:$0xf]
    %v742 = vld [vmem:[#allocation20 + $0x4] sm:$0xf]
    %v743 = vld [vmem:[#allocation20 + $0x8] sm:$0xf]
    %v744 = vld [vmem:[#allocation20 + $0xc] sm:$0xf]
    %v745 = vpack.c.bf16 %v740, %v740
    %v746 = vld [vmem:[#allocation10 + $0x14] ss:$0 sm:$0xff]
    %v751 = vunpack.c.l.b16 %v741
    %v752 = vunpack.c.l.b16 %v742
    %v753 = vunpack.c.l.b16 %v743
    %v754 = vunpack.c.l.b16 %v744
    %v755 = vpack.c.b16 %v752, %v751
    %v756 = vpack.c.b16 %v754, %v753
    %v760 = vsel %vm294, %v745, 0
    %762 = vmatprep.subr.bf16.mxu0 0
    %763 = vmatpush1.bf16.msra.mxu0 0
    %764 = vmatprep.subr.bf16.mxu0 0
    %765 = vmatpush1.bf16.msra.mxu0 0
    %766 = vmatprep.subr.bf16.mxu0 0
    %767 = vmatpush1.bf16.msra.mxu0 0
    %768 = vmatprep.subr.bf16.mxu0 0
    %769 = vmatpush1.bf16.msra.mxu0 0
    %770 = vmatprep.subr.bf16.mxu0 0
    %771 = vmatpush1.bf16.msra.mxu0 0
    %772 = vmatprep.subr.bf16.mxu0 0
    %773 = vmatpush1.bf16.msra.mxu0 0
    %774 = vmatprep.subr.bf16.mxu0 0
    %775 = vmatpush1.bf16.msra.mxu0 %v756
    %776 = vmatprep.subr.bf16.mxu0 0
    %777 = vmatpush1.bf16.msra.mxu0 %v755
    %778 = vmatprep.subr.bf16.mxu0 0
    %779 = vmatpush2.bf16.msra.mxu0 0
    %780 = vmatprep.subr.bf16.mxu0 0
    %781 = vmatpush2.bf16.msra.mxu0 0
    %782 = vmatprep.subr.bf16.mxu0 0
    %783 = vmatpush2.bf16.msra.mxu0 0
    %784 = vmatprep.subr.bf16.mxu0 0
    %785 = vmatpush2.bf16.msra.mxu0 0
    %786 = vmatprep.subr.bf16.mxu0 0
    %787 = vmatpush2.bf16.msra.mxu0 0
    %788 = vmatprep.subr.bf16.mxu0 0
    %789 = vmatpush2.bf16.msra.mxu0 0
    %790 = vmatprep.subr.bf16.mxu0 0
    %791 = vmatpush2.bf16.msra.mxu0 0
    %792 = vmatprep.subr.bf16.mxu0 0
    %793 = vmatpush2.bf16.msra.mxu0 0
    %794 = vmatprep.mubr.bf16.mxu0 0
    %795 = vmatmul.mubr.bf16.gmra.mxu0 %v760
    %v796 = vpop.f32.mrf.mxu0
    %v797 = vadd.f32 %v746, %v796
    %v798 = vpop.f32.mrf.mxu0
    %v799 = vpop.f32.mrf.mxu0
    %v800 = vpop.f32.mrf.mxu0
    %801 = vdwg.mxu0
    %802 = vst [vmem:[#allocation23] sm:$0xff] %v797
    // Predicated region
    $region102: #{tpu_custom_call.1} parent=1 // pred_check
      _
    $region103: #{tpu_custom_call.1} parent=1 // pred_check_branch
      %804 = sbr.rel (0) target = $region105
    $region104: #{tpu_custom_call.1} parent=1 // pred_region
      %s806 = ssub.s32 128, 128
      %807 = vsyncadd [#allocation4], %s806
      %s809 = sshll.u32 [#allocation22], 4
      %s810 = int_to_ptr.vmem [resolvable:$true] %s809
      %812 = dma.vmem_to_hbm [thread:$0]  %s810, 128, %s13, [#allocation4]
    $region105: #{tpu_custom_call.1} parent=1 // pred_fallthru
      _
    // Predicated region
    $region106: #{tpu_custom_call.1} parent=1 // pred_check
      _
    $region107: #{tpu_custom_call.1} parent=1 // pred_check_branch
      %814 = sbr.rel (0) target = $region109
    $region108: #{tpu_custom_call.1} parent=1 // pred_region
      %s816 = ssub.s32 128, 128
      %817 = vsyncadd [#allocation24], %s816
      %s819 = sshll.u32 [#allocation23], 4
      %s820 = int_to_ptr.vmem [resolvable:$true] %s819
      %822 = dma.vmem_to_hbm [thread:$0]  %s820, 128, %s14, [#allocation24]
    $region109: #{tpu_custom_call.1} parent=1 // pred_fallthru
      _
    // Predicated region
    $region110: #{tpu_custom_call.1} parent=1 // pred_check
      _
    $region111: #{tpu_custom_call.1} parent=1 // pred_check_branch
      %824 = sbr.rel (0) target = $region113
    $region112: #{tpu_custom_call.1} parent=1 // pred_region
      %825 = dma.done [#allocation4], 128
    $region113: #{tpu_custom_call.1} parent=1 // pred_fallthru
      _
    // Predicated region
    $region114: #{tpu_custom_call.1} parent=1 // pred_check
      _
    $region115: #{tpu_custom_call.1} parent=1 // pred_check_branch
      %827 = sbr.rel (0) target = $region117
    $region116: #{tpu_custom_call.1} parent=1 // pred_region
      %828 = dma.done [#allocation24], 128
    $region117: #{tpu_custom_call.1} parent=1 // pred_fallthru
      _
    %829 = vsyncpa [#allocation3], 1
    %830 = vsyncpa [#allocation6], 1
    %831 = vsyncpa [#allocation9], 1
    %832 = vsyncpa [#allocation12], 1
    %833 = vsyncpa [#allocation15], 1
    %834 = vsyncpa [#allocation18], 1
    %835 = vsyncpa [#allocation21], 1
    %836 = vsyncpa [#allocation4], 1
    %837 = vsyncpa [#allocation24], 1

</llo_original>
